<compile_context>
chip_gen: v5e
topology: v5e:2x2
jax: 0.10.0
libtpu: 0.0.40
codegen_flags: <defaults>
</compile_context>

<pallas_src>
import math

import jax
import jax.numpy as jnp
import numpy as np
from jax import lax
from jax.experimental import pallas as pl
from jax.experimental.pallas import tpu as pltpu

# ---- physical / config constants (EnhancedPhysicsConfig defaults) ----
G = 9.81
RHO = 1025.0
MSE_WEIGHT = 1.0                    # config.mse_weight
CIRCULAR_WEIGHT = 1.0               # config.circular_weight
BASE_PHYSICS_WEIGHT = 0.1           # physics_weight passed to CircularLoss
WAVE_EQUATION_WEIGHT = 0.1          # config.wave_equation_weight
ENERGY_CONSERVATION_WEIGHT = 0.05   # config.energy_conservation_weight
STEEPNESS_WEIGHT = 0.1              # literal 0.1 * steepness_loss in forward()

_ENERGY_COEF = 0.125 * RHO * G        # E = (1/8) rho g H^2
_WAVELEN_COEF = G / (2.0 * math.pi)   # L = g T^2 / (2 pi)

_N_ACC = 7   # mse, circ, dot, unit_circle, range_pen(swh+mwp), steep_hi, steep_lo


def _make_kernel(cs, n_chunks, n_nodes, n_batch, pad_per_batch, approx_recip):
    inv_cnt = 1.0 / float(n_batch * n_nodes)
    inv_n = 1.0 / float(n_nodes)
    inv_var_den = 1.0 / float(max(n_nodes - 1, 1))   # guard N==1 (torch.var -> NaN)
    inv_b = 1.0 / float(n_batch)
    pad_total = float(n_batch * pad_per_batch)
    unroll = max(1, min(8, n_chunks))

    def kernel(data_ref, out_ref, acc_ref, eacc_ref, evar_ref):
        b = pl.program_id(0)
        t = pl.program_id(1)
        last_b = pl.num_programs(0) - 1
        last_t = pl.num_programs(1) - 1

        @pl.when(jnp.logical_and(b == 0, t == 0))
        def _init_global():
            acc_ref[...] = jnp.zeros_like(acc_ref)
            evar_ref[0] = jnp.float32(0.0)

        @pl.when(t == 0)
        def _init_batch():
            eacc_ref[...] = jnp.zeros_like(eacc_ref)

        relu = lambda x: jnp.maximum(x, 0.0)

        # Walk the big DMA block in one-vreg chunks; per-component partial sums
        # are carried as vreg values (no accumulator RMW inside the loop).
        def chunk(i, carry):
            mse_a, circ_a, dot_a, uc_a, pen_a, shi_a, slo_a, h2_a, h4_a = carry
            s = pl.multiple_of(i * cs, cs)
            rows = pl.ds(s, cs)

            def load(f):
                v = data_ref[f, 0, rows, :]
                return v if v.dtype == jnp.float32 else v.astype(jnp.float32)

            swh_p, cos_p, sin_p, mwp_p = load(0), load(1), load(2), load(3)
            swh_t, cos_t, sin_t, mwp_t = load(4), load(5), load(6), load(7)

            mse_a = mse_a + (swh_p - swh_t) ** 2 + (mwp_p - mwp_t) ** 2
            circ_a = circ_a + (cos_p - cos_t) ** 2 + (sin_p - sin_t) ** 2
            dot_a = dot_a + cos_p * cos_t + sin_p * sin_t
            uc_a = uc_a + (cos_p * cos_p + sin_p * sin_p - 1.0) ** 2
            pen_a = pen_a + (relu(-swh_p) + relu(swh_p - 20.0)
                             + relu(1.0 - mwp_p) + relu(mwp_p - 25.0))
            wavelength = _WAVELEN_COEF * (mwp_p * mwp_p) + 1e-6
            if approx_recip:
                steep = swh_p * pl.reciprocal(wavelength, approx=True)
            else:
                steep = swh_p / wavelength
            shi_a = shi_a + relu(steep - 0.14)
            slo_a = slo_a + relu(0.01 - steep)
            h2 = swh_p * swh_p
            h2_a = h2_a + h2
            h4_a = h4_a + h2 * h2
            return (mse_a, circ_a, dot_a, uc_a, pen_a, shi_a, slo_a, h2_a, h4_a)

        zero = jnp.zeros((cs, 128), jnp.float32)
        carry = lax.fori_loop(0, n_chunks, chunk, (zero,) * 9, unroll=unroll)
        mse_a, circ_a, dot_a, uc_a, pen_a, shi_a, slo_a, h2_a, h4_a = carry

        # single flush per grid step (scratch persists across the whole grid)
        acc_ref[0] += mse_a
        acc_ref[1] += circ_a
        acc_ref[2] += dot_a
        acc_ref[3] += uc_a
        acc_ref[4] += pen_a
        acc_ref[5] += shi_a
        acc_ref[6] += slo_a
        eacc_ref[0] += h2_a
        eacc_ref[1] += h4_a

        # per-batch finalize: unbiased variance of wave energy over nodes
        @pl.when(t == last_t)
        def _end_batch():
            sh2 = jnp.sum(eacc_ref[0])
            sh4 = jnp.sum(eacc_ref[1])
            # TODO(synk): sum / sum-of-squares cancels for very large N; switch
            #             to a shifted (per-batch reference) accumulation there.
            var_h2 = (sh4 - sh2 * sh2 * inv_n) * inv_var_den
            evar_ref[0] += (_ENERGY_COEF * _ENERGY_COEF) * var_h2

        # global finalize: one cross-lane reduction per loss component
        @pl.when(jnp.logical_and(b == last_b, t == last_t))
        def _finalize():
            mse_loss = jnp.sum(acc_ref[0]) * inv_cnt
            circular = jnp.sum(acc_ref[1]) * inv_cnt
            angular = 1.0 - jnp.sum(acc_ref[2]) * inv_cnt
            # zero-padding contributes exact constants to these three sums:
            unit_circle = (jnp.sum(acc_ref[3]) - pad_total) * inv_cnt
            range_pen = (jnp.sum(acc_ref[4]) - pad_total) * inv_cnt
            steep_hi = jnp.sum(acc_ref[5]) * inv_cnt
            steep_lo = (jnp.sum(acc_ref[6]) - 0.01 * pad_total) * inv_cnt

            base_total = (MSE_WEIGHT * mse_loss
                          + CIRCULAR_WEIGHT * (circular + angular)
                          + BASE_PHYSICS_WEIGHT * unit_circle)
            physics_loss = range_pen + unit_circle + steep_hi
            energy_loss = evar_ref[0] * inv_b
            steepness_loss = steep_lo + steep_hi
            total = (base_total
                     + WAVE_EQUATION_WEIGHT * physics_loss
                     + ENERGY_CONSERVATION_WEIGHT * energy_loss
                     + STEEPNESS_WEIGHT * steepness_loss)

            out_ref[0] = total
            out_ref[1] = base_total
            out_ref[2] = circular
            out_ref[3] = angular
            out_ref[4] = physics_loss
            out_ref[5] = energy_loss
            out_ref[6] = steepness_loss
            out_ref[7] = jnp.float32(0.0)

    return kernel


def enhanced_physics_informed_loss(predictions, targets, *,
                                   max_tile_rows=1024, approx_reciprocal=True):
    """predictions, targets: [B, N, F>=4] (float32 or bfloat16) -> dict of scalars."""
    B, N, F = predictions.shape
    assert F >= 4 and targets.shape[0] == B and targets.shape[1] == N

    # single fused concat+transpose -> one feature-major stream
    # features: [swh_p, cos_p, sin_p, mwp_p, swh_t, cos_t, sin_t, mwp_t]
    data = jnp.concatenate(
        [predictions[..., :4], targets[..., :4]], axis=-1)    # [B, N, 8]
    data = jnp.transpose(data, (2, 0, 1))                      # [8, B, N]

    cs = 16 if data.dtype == jnp.bfloat16 else 8   # chunk rows = one full vreg
    rows = pl.cdiv(N, 128)                         # 128-lane rows per batch
    rows_cs = ((rows + cs - 1) // cs) * cs
    mtr = max(cs, (int(max_tile_rows) // cs) * cs)
    tile_r = min(mtr, rows_cs)                     # multiple of cs (and of 8)
    n_tiles = pl.cdiv(rows, tile_r)
    rows_pad = n_tiles * tile_r
    n_pad = rows_pad * 128
    if n_pad != N:
        data = jnp.pad(data, ((0, 0), (0, 0), (0, n_pad - N)))
    data = data.reshape(8, B, rows_pad, 128)

    kernel = _make_kernel(cs, tile_r // cs, N, B, n_pad - N, approx_reciprocal)

    out = pl.pallas_call(
        kernel,
        out_shape=jax.ShapeDtypeStruct((8,), jnp.float32),
        grid=(B, n_tiles),
        in_specs=[pl.BlockSpec((8, 1, tile_r, 128), lambda b, t: (0, b, t, 0))],
        out_specs=pl.BlockSpec(memory_space=pltpu.MemorySpace.SMEM),
        scratch_shapes=[
            pltpu.VMEM((_N_ACC, cs, 128), jnp.float32),  # per-lane loss sums
            pltpu.VMEM((2, cs, 128), jnp.float32),       # per-batch sum(H^2), sum(H^4)
            pltpu.SMEM((1,), jnp.float32),               # running sum of per-batch var
        ],
        compiler_params=pltpu.CompilerParams(
            dimension_semantics=("arbitrary", "arbitrary"),
            vmem_limit_bytes=48 * 1024 * 1024),
    )(data)

    return {
        "total_loss": out[0],
        "base_loss": out[1],
        "circular_loss": out[2],
        "angular_loss": out[3],
        "wave_physics_loss": out[4],
        "energy_loss": out[5],
        "steepness_loss": out[6],
    }


# ---------------------------------------------------------------------------
# pure-JAX reference (same math, no Pallas) for the correctness check
# ---------------------------------------------------------------------------
def _reference(predictions, targets):
    p = predictions.astype(jnp.float32)
    t = targets.astype(jnp.float32)
    swh_p, cos_p, sin_p, mwp_p = p[:, :, 0], p[:, :, 1], p[:, :, 2], p[:, :, 3]
    swh_t, cos_t, sin_t, mwp_t = t[:, :, 0], t[:, :, 1], t[:, :, 2], t[:, :, 3]
    relu = lambda x: jnp.maximum(x, 0.0)

    mse = jnp.mean((swh_p - swh_t) ** 2) + jnp.mean((mwp_p - mwp_t) ** 2)
    circ = jnp.mean((cos_p - cos_t) ** 2 + (sin_p - sin_t) ** 2)
    ang = jnp.mean(1.0 - (cos_p * cos_t + sin_p * sin_t))
    uc = cos_p ** 2 + sin_p ** 2
    base_phys = jnp.mean((uc - 1.0) ** 2)
    base = MSE_WEIGHT * mse + CIRCULAR_WEIGHT * (circ + ang) + BASE_PHYSICS_WEIGHT * base_phys

    swh_pen = jnp.mean(relu(-swh_p)) + jnp.mean(relu(swh_p - 20.0))
    mwp_pen = jnp.mean(relu(1.0 - mwp_p)) + jnp.mean(relu(mwp_p - 25.0))
    circle_pen = jnp.mean((uc - 1.0) ** 2)
    L = G * mwp_p ** 2 / (2.0 * math.pi)
    st = swh_p / (L + 1e-6)
    phys = swh_pen + mwp_pen + circle_pen + jnp.mean(relu(st - 0.14))

    e = (1.0 / 8.0) * RHO * G * swh_p ** 2
    energy = jnp.mean(jnp.var(e, axis=1, ddof=1))

    st_loss = jnp.mean(relu(0.01 - st)) + jnp.mean(relu(st - 0.14))

    total = (base + WAVE_EQUATION_WEIGHT * phys
             + ENERGY_CONSERVATION_WEIGHT * energy + STEEPNESS_WEIGHT * st_loss)
    return {"total_loss": total, "base_loss": base, "circular_loss": circ,
            "angular_loss": ang, "wave_physics_loss": phys,
            "energy_loss": energy, "steepness_loss": st_loss}


def _make_inputs(key, B, N, dtype=jnp.float32):
    ks = jax.random.split(key, 6)
    swh_p = jax.random.uniform(ks[0], (B, N), minval=0.5, maxval=4.0)
    th_p = jax.random.uniform(ks[1], (B, N), minval=0.0, maxval=2.0 * math.pi)
    mwp_p = jax.random.uniform(ks[2], (B, N), minval=4.0, maxval=12.0)
    pred = jnp.stack([swh_p, jnp.cos(th_p), jnp.sin(th_p), mwp_p],
                     axis=-1).astype(dtype)
    swh_t = jax.random.uniform(ks[3], (B, N), minval=0.5, maxval=4.0)
    th_t = jax.random.uniform(ks[4], (B, N), minval=0.0, maxval=2.0 * math.pi)
    mwp_t = jax.random.uniform(ks[5], (B, N), minval=4.0, maxval=12.0)
    tgt = jnp.stack([swh_t, jnp.cos(th_t), jnp.sin(th_t), mwp_t],
                    axis=-1).astype(dtype)
    return pred, tgt


if __name__ == "__main__":
    key = jax.random.PRNGKey(0)

    configs = [
        # (B, N, max_tile_rows, dtype, tol)
        (2, 6000, 16,   jnp.float32,  2e-3),  # multi-tile grid + padding, 2 chunks/tile
        (2, 6000, 1024, jnp.float32,  2e-3),  # one big tile, fori_loop over 6 chunks
        (3, 1024, 1024, jnp.float32,  2e-3),  # exact fit, no padding
        (2, 640,  1024, jnp.bfloat16, 5e-3),  # bf16 path: 16-row chunks + padding
    ]
    for (B, N, mtr, dtype, tol) in configs:
        pred, tgt = _make_inputs(jax.random.fold_in(key, 7 * N + B), B, N, dtype)
        out = enhanced_physics_informed_loss(pred, tgt, max_tile_rows=mtr)
        out = jax.tree_util.tree_map(jax.block_until_ready, out)
        ref = _reference(pred, tgt)
        for name in out:
            np.testing.assert_allclose(
                np.asarray(out[name]), np.asarray(ref[name]),
                rtol=tol, atol=tol,
                err_msg=f"mismatch in {name} for B={B}, N={N}, dtype={dtype}")

    print("KERNEL_OK")
</pallas_src>

<mosaic_0001>
module attributes {stable_mosaic.version = 11 : i64} {
  func.func @kernel(%arg0: i32, %arg1: i32, %arg2: memref<8x1x16x128xf32, #tpu.memory_space<vmem>>, %arg3: memref<8xf32, #tpu.memory_space<smem>>, %arg4: memref<7x8x128xf32, #tpu.memory_space<vmem>>, %arg5: memref<2x8x128xf32, #tpu.memory_space<vmem>>, %arg6: memref<1xf32, #tpu.memory_space<smem>>) attributes {dimension_semantics = [#tpu.dimension_semantics<arbitrary>, #tpu.dimension_semantics<arbitrary>], iteration_bounds = array<i64: 2, 3>, scalar_prefetch = 0 : i64, scratch_operands = 3 : i64, tpu.core_type = #tpu.core_type<tc>, window_params = [{transform_indices = @transform_0, window_bounds = array<i64: 8, 1, 16, 128>}, {transform_indices = @transform_1, window_bounds = array<i64: 8>}]} {
    %c0_i32 = arith.constant 0 : i32
    %0 = arith.cmpi eq, %arg0, %c0_i32 : i32
    %c0_i32_0 = arith.constant 0 : i32
    %1 = arith.cmpi eq, %arg1, %c0_i32_0 : i32
    %2 = arith.andi %0, %1 : i1
    %3 = arith.extui %2 : i1 to i32
    %c0_i32_1 = arith.constant 0 : i32
    %4 = arith.cmpi ne, %3, %c0_i32_1 : i32
    scf.if %4 {
      %cst_135 = arith.constant 0.000000e+00 : f32
      %251 = vector.broadcast %cst_135 : f32 to vector<7x8x128xf32>
      %c0_136 = arith.constant 0 : index
      %c0_137 = arith.constant 0 : index
      %c0_138 = arith.constant 0 : index
      %252 = vector.load %arg4[%c0_136, %c0_137, %c0_138] : memref<7x8x128xf32, #tpu.memory_space<vmem>>, vector<7x8x128xf32>
      tpu.vector_store %arg4[%c0_136, %c0_137, %c0_138], %251 {strides = array<i32>} : memref<7x8x128xf32, #tpu.memory_space<vmem>>, vector<7x8x128xf32>,
      %cst_139 = arith.constant 0.000000e+00 : f32
      %c0_140 = arith.constant 0 : index
      %253 = memref.load %arg6[%c0_140] : memref<1xf32, #tpu.memory_space<smem>>
      memref.store %cst_139, %arg6[%c0_140] : memref<1xf32, #tpu.memory_space<smem>>
    } else {
    }
    %c0_i32_2 = arith.constant 0 : i32
    %5 = arith.cmpi eq, %arg1, %c0_i32_2 : i32
    %6 = arith.extui %5 : i1 to i32
    %c0_i32_3 = arith.constant 0 : i32
    %7 = arith.cmpi ne, %6, %c0_i32_3 : i32
    scf.if %7 {
      %cst_135 = arith.constant 0.000000e+00 : f32
      %251 = vector.broadcast %cst_135 : f32 to vector<2x8x128xf32>
      %c0_136 = arith.constant 0 : index
      %c0_137 = arith.constant 0 : index
      %c0_138 = arith.constant 0 : index
      %252 = vector.load %arg5[%c0_136, %c0_137, %c0_138] : memref<2x8x128xf32, #tpu.memory_space<vmem>>, vector<2x8x128xf32>
      tpu.vector_store %arg5[%c0_136, %c0_137, %c0_138], %251 {strides = array<i32>} : memref<2x8x128xf32, #tpu.memory_space<vmem>>, vector<2x8x128xf32>,
    } else {
    }
    %cst = arith.constant 0.000000e+00 : f32
    %8 = vector.broadcast %cst : f32 to vector<8x128xf32>
    %c0_i32_4 = arith.constant 0 : i32
    %c8_i32 = arith.constant 8 : i32
    %9 = arith.muli %c0_i32_4, %c8_i32 : i32
    %10 = tpu.assume_multiple %9, 8 : i32
    %c0 = arith.constant 0 : index
    %c0_5 = arith.constant 0 : index
    %11 = arith.index_cast %10 : i32 to index
    %c0_6 = arith.constant 0 : index
    %12 = vector.load %arg2[%c0, %c0_5, %11, %c0_6] : memref<8x1x16x128xf32, #tpu.memory_space<vmem>>, vector<1x1x8x128xf32>
    %13 = vector.shape_cast %12 : vector<1x1x8x128xf32> to vector<8x128xf32>
    %c1 = arith.constant 1 : index
    %c0_7 = arith.constant 0 : index
    %14 = arith.index_cast %10 : i32 to index
    %c0_8 = arith.constant 0 : index
    %15 = vector.load %arg2[%c1, %c0_7, %14, %c0_8] : memref<8x1x16x128xf32, #tpu.memory_space<vmem>>, vector<1x1x8x128xf32>
    %16 = vector.shape_cast %15 : vector<1x1x8x128xf32> to vector<8x128xf32>
    %c2 = arith.constant 2 : index
    %c0_9 = arith.constant 0 : index
    %17 = arith.index_cast %10 : i32 to index
    %c0_10 = arith.constant 0 : index
    %18 = vector.load %arg2[%c2, %c0_9, %17, %c0_10] : memref<8x1x16x128xf32, #tpu.memory_space<vmem>>, vector<1x1x8x128xf32>
    %19 = vector.shape_cast %18 : vector<1x1x8x128xf32> to vector<8x128xf32>
    %c3 = arith.constant 3 : index
    %c0_11 = arith.constant 0 : index
    %20 = arith.index_cast %10 : i32 to index
    %c0_12 = arith.constant 0 : index
    %21 = vector.load %arg2[%c3, %c0_11, %20, %c0_12] : memref<8x1x16x128xf32, #tpu.memory_space<vmem>>, vector<1x1x8x128xf32>
    %22 = vector.shape_cast %21 : vector<1x1x8x128xf32> to vector<8x128xf32>
    %c4 = arith.constant 4 : index
    %c0_13 = arith.constant 0 : index
    %23 = arith.index_cast %10 : i32 to index
    %c0_14 = arith.constant 0 : index
    %24 = vector.load %arg2[%c4, %c0_13, %23, %c0_14] : memref<8x1x16x128xf32, #tpu.memory_space<vmem>>, vector<1x1x8x128xf32>
    %25 = vector.shape_cast %24 : vector<1x1x8x128xf32> to vector<8x128xf32>
    %c5 = arith.constant 5 : index
    %c0_15 = arith.constant 0 : index
    %26 = arith.index_cast %10 : i32 to index
    %c0_16 = arith.constant 0 : index
    %27 = vector.load %arg2[%c5, %c0_15, %26, %c0_16] : memref<8x1x16x128xf32, #tpu.memory_space<vmem>>, vector<1x1x8x128xf32>
    %28 = vector.shape_cast %27 : vector<1x1x8x128xf32> to vector<8x128xf32>
    %c6 = arith.constant 6 : index
    %c0_17 = arith.constant 0 : index
    %29 = arith.index_cast %10 : i32 to index
    %c0_18 = arith.constant 0 : index
    %30 = vector.load %arg2[%c6, %c0_17, %29, %c0_18] : memref<8x1x16x128xf32, #tpu.memory_space<vmem>>, vector<1x1x8x128xf32>
    %31 = vector.shape_cast %30 : vector<1x1x8x128xf32> to vector<8x128xf32>
    %c7 = arith.constant 7 : index
    %c0_19 = arith.constant 0 : index
    %32 = arith.index_cast %10 : i32 to index
    %c0_20 = arith.constant 0 : index
    %33 = vector.load %arg2[%c7, %c0_19, %32, %c0_20] : memref<8x1x16x128xf32, #tpu.memory_space<vmem>>, vector<1x1x8x128xf32>
    %34 = vector.shape_cast %33 : vector<1x1x8x128xf32> to vector<8x128xf32>
    %35 = arith.subf %13, %25 : vector<8x128xf32>
    %36 = arith.mulf %35, %35 : vector<8x128xf32>
    %37 = arith.addf %8, %36 : vector<8x128xf32>
    %38 = arith.subf %22, %34 : vector<8x128xf32>
    %39 = arith.mulf %38, %38 : vector<8x128xf32>
    %40 = arith.addf %37, %39 : vector<8x128xf32>
    %41 = arith.subf %16, %28 : vector<8x128xf32>
    %42 = arith.mulf %41, %41 : vector<8x128xf32>
    %43 = arith.addf %8, %42 : vector<8x128xf32>
    %44 = arith.subf %19, %31 : vector<8x128xf32>
    %45 = arith.mulf %44, %44 : vector<8x128xf32>
    %46 = arith.addf %43, %45 : vector<8x128xf32>
    %47 = arith.mulf %16, %28 : vector<8x128xf32>
    %48 = arith.addf %8, %47 : vector<8x128xf32>
    %49 = arith.mulf %19, %31 : vector<8x128xf32>
    %50 = arith.addf %48, %49 : vector<8x128xf32>
    %51 = arith.mulf %16, %16 : vector<8x128xf32>
    %52 = arith.mulf %19, %19 : vector<8x128xf32>
    %53 = arith.addf %51, %52 : vector<8x128xf32>
    %cst_21 = arith.constant 1.000000e+00 : f32
    %54 = vector.broadcast %cst_21 : f32 to vector<8x128xf32>
    %55 = arith.subf %53, %54 : vector<8x128xf32>
    %56 = arith.mulf %55, %55 : vector<8x128xf32>
    %57 = arith.addf %8, %56 : vector<8x128xf32>
    %cst_22 = arith.constant 0.000000e+00 : f32
    %58 = vector.broadcast %cst_22 : f32 to vector<8x128xf32>
    %59 = arith.subf %58, %13 : vector<8x128xf32>
    %cst_23 = arith.constant 0.000000e+00 : f32
    %60 = vector.broadcast %cst_23 : f32 to vector<8x128xf32>
    %61 = arith.maximumf %59, %60 : vector<8x128xf32>
    %cst_24 = arith.constant 2.000000e+01 : f32
    %62 = vector.broadcast %cst_24 : f32 to vector<8x128xf32>
    %63 = arith.subf %13, %62 : vector<8x128xf32>
    %cst_25 = arith.constant 0.000000e+00 : f32
    %64 = vector.broadcast %cst_25 : f32 to vector<8x128xf32>
    %65 = arith.maximumf %63, %64 : vector<8x128xf32>
    %66 = arith.addf %61, %65 : vector<8x128xf32>
    %cst_26 = arith.constant 1.000000e+00 : f32
    %67 = vector.broadcast %cst_26 : f32 to vector<8x128xf32>
    %68 = arith.subf %67, %22 : vector<8x128xf32>
    %cst_27 = arith.constant 0.000000e+00 : f32
    %69 = vector.broadcast %cst_27 : f32 to vector<8x128xf32>
    %70 = arith.maximumf %68, %69 : vector<8x128xf32>
    %71 = arith.addf %66, %70 : vector<8x128xf32>
    %cst_28 = arith.constant 2.500000e+01 : f32
    %72 = vector.broadcast %cst_28 : f32 to vector<8x128xf32>
    %73 = arith.subf %22, %72 : vector<8x128xf32>
    %cst_29 = arith.constant 0.000000e+00 : f32
    %74 = vector.broadcast %cst_29 : f32 to vector<8x128xf32>
    %75 = arith.maximumf %73, %74 : vector<8x128xf32>
    %76 = arith.addf %71, %75 : vector<8x128xf32>
    %77 = arith.addf %8, %76 : vector<8x128xf32>
    %78 = arith.mulf %22, %22 : vector<8x128xf32>
    %cst_30 = arith.constant 1.56130993 : f32
    %79 = vector.broadcast %cst_30 : f32 to vector<8x128xf32>
    %80 = arith.mulf %79, %78 : vector<8x128xf32>
    %cst_31 = arith.constant 9.99999997E-7 : f32
    %81 = vector.broadcast %cst_31 : f32 to vector<8x128xf32>
    %82 = arith.addf %80, %81 : vector<8x128xf32>
    %83 = tpu.reciprocal %82 {approx = true} : vector<8x128xf32> -> vector<8x128xf32>
    %84 = arith.mulf %13, %83 : vector<8x128xf32>
    %cst_32 = arith.constant 1.400000e-01 : f32
    %85 = vector.broadcast %cst_32 : f32 to vector<8x128xf32>
    %86 = arith.subf %84, %85 : vector<8x128xf32>
    %cst_33 = arith.constant 0.000000e+00 : f32
    %87 = vector.broadcast %cst_33 : f32 to vector<8x128xf32>
    %88 = arith.maximumf %86, %87 : vector<8x128xf32>
    %89 = arith.addf %8, %88 : vector<8x128xf32>
    %cst_34 = arith.constant 0.00999999977 : f32
    %90 = vector.broadcast %cst_34 : f32 to vector<8x128xf32>
    %91 = arith.subf %90, %84 : vector<8x128xf32>
    %cst_35 = arith.constant 0.000000e+00 : f32
    %92 = vector.broadcast %cst_35 : f32 to vector<8x128xf32>
    %93 = arith.maximumf %91, %92 : vector<8x128xf32>
    %94 = arith.addf %8, %93 : vector<8x128xf32>
    %95 = arith.mulf %13, %13 : vector<8x128xf32>
    %96 = arith.addf %8, %95 : vector<8x128xf32>
    %97 = arith.mulf %95, %95 : vector<8x128xf32>
    %98 = arith.addf %8, %97 : vector<8x128xf32>
    %c1_i32 = arith.constant 1 : i32
    %c8_i32_36 = arith.constant 8 : i32
    %99 = arith.muli %c1_i32, %c8_i32_36 : i32
    %100 = tpu.assume_multiple %99, 8 : i32
    %c0_37 = arith.constant 0 : index
    %c0_38 = arith.constant 0 : index
    %101 = arith.index_cast %100 : i32 to index
    %c0_39 = arith.constant 0 : index
    %102 = vector.load %arg2[%c0_37, %c0_38, %101, %c0_39] : memref<8x1x16x128xf32, #tpu.memory_space<vmem>>, vector<1x1x8x128xf32>
    %103 = vector.shape_cast %102 : vector<1x1x8x128xf32> to vector<8x128xf32>
    %c1_40 = arith.constant 1 : index
    %c0_41 = arith.constant 0 : index
    %104 = arith.index_cast %100 : i32 to index
    %c0_42 = arith.constant 0 : index
    %105 = vector.load %arg2[%c1_40, %c0_41, %104, %c0_42] : memref<8x1x16x128xf32, #tpu.memory_space<vmem>>, vector<1x1x8x128xf32>
    %106 = vector.shape_cast %105 : vector<1x1x8x128xf32> to vector<8x128xf32>
    %c2_43 = arith.constant 2 : index
    %c0_44 = arith.constant 0 : index
    %107 = arith.index_cast %100 : i32 to index
    %c0_45 = arith.constant 0 : index
    %108 = vector.load %arg2[%c2_43, %c0_44, %107, %c0_45] : memref<8x1x16x128xf32, #tpu.memory_space<vmem>>, vector<1x1x8x128xf32>
    %109 = vector.shape_cast %108 : vector<1x1x8x128xf32> to vector<8x128xf32>
    %c3_46 = arith.constant 3 : index
    %c0_47 = arith.constant 0 : index
    %110 = arith.index_cast %100 : i32 to index
    %c0_48 = arith.constant 0 : index
    %111 = vector.load %arg2[%c3_46, %c0_47, %110, %c0_48] : memref<8x1x16x128xf32, #tpu.memory_space<vmem>>, vector<1x1x8x128xf32>
    %112 = vector.shape_cast %111 : vector<1x1x8x128xf32> to vector<8x128xf32>
    %c4_49 = arith.constant 4 : index
    %c0_50 = arith.constant 0 : index
    %113 = arith.index_cast %100 : i32 to index
    %c0_51 = arith.constant 0 : index
    %114 = vector.load %arg2[%c4_49, %c0_50, %113, %c0_51] : memref<8x1x16x128xf32, #tpu.memory_space<vmem>>, vector<1x1x8x128xf32>
    %115 = vector.shape_cast %114 : vector<1x1x8x128xf32> to vector<8x128xf32>
    %c5_52 = arith.constant 5 : index
    %c0_53 = arith.constant 0 : index
    %116 = arith.index_cast %100 : i32 to index
    %c0_54 = arith.constant 0 : index
    %117 = vector.load %arg2[%c5_52, %c0_53, %116, %c0_54] : memref<8x1x16x128xf32, #tpu.memory_space<vmem>>, vector<1x1x8x128xf32>
    %118 = vector.shape_cast %117 : vector<1x1x8x128xf32> to vector<8x128xf32>
    %c6_55 = arith.constant 6 : index
    %c0_56 = arith.constant 0 : index
    %119 = arith.index_cast %100 : i32 to index
    %c0_57 = arith.constant 0 : index
    %120 = vector.load %arg2[%c6_55, %c0_56, %119, %c0_57] : memref<8x1x16x128xf32, #tpu.memory_space<vmem>>, vector<1x1x8x128xf32>
    %121 = vector.shape_cast %120 : vector<1x1x8x128xf32> to vector<8x128xf32>
    %c7_58 = arith.constant 7 : index
    %c0_59 = arith.constant 0 : index
    %122 = arith.index_cast %100 : i32 to index
    %c0_60 = arith.constant 0 : index
    %123 = vector.load %arg2[%c7_58, %c0_59, %122, %c0_60] : memref<8x1x16x128xf32, #tpu.memory_space<vmem>>, vector<1x1x8x128xf32>
    %124 = vector.shape_cast %123 : vector<1x1x8x128xf32> to vector<8x128xf32>
    %125 = arith.subf %103, %115 : vector<8x128xf32>
    %126 = arith.mulf %125, %125 : vector<8x128xf32>
    %127 = arith.addf %40, %126 : vector<8x128xf32>
    %128 = arith.subf %112, %124 : vector<8x128xf32>
    %129 = arith.mulf %128, %128 : vector<8x128xf32>
    %130 = arith.addf %127, %129 : vector<8x128xf32>
    %131 = arith.subf %106, %118 : vector<8x128xf32>
    %132 = arith.mulf %131, %131 : vector<8x128xf32>
    %133 = arith.addf %46, %132 : vector<8x128xf32>
    %134 = arith.subf %109, %121 : vector<8x128xf32>
    %135 = arith.mulf %134, %134 : vector<8x128xf32>
    %136 = arith.addf %133, %135 : vector<8x128xf32>
    %137 = arith.mulf %106, %118 : vector<8x128xf32>
    %138 = arith.addf %50, %137 : vector<8x128xf32>
    %139 = arith.mulf %109, %121 : vector<8x128xf32>
    %140 = arith.addf %138, %139 : vector<8x128xf32>
    %141 = arith.mulf %106, %106 : vector<8x128xf32>
    %142 = arith.mulf %109, %109 : vector<8x128xf32>
    %143 = arith.addf %141, %142 : vector<8x128xf32>
    %cst_61 = arith.constant 1.000000e+00 : f32
    %144 = vector.broadcast %cst_61 : f32 to vector<8x128xf32>
    %145 = arith.subf %143, %144 : vector<8x128xf32>
    %146 = arith.mulf %145, %145 : vector<8x128xf32>
    %147 = arith.addf %57, %146 : vector<8x128xf32>
    %cst_62 = arith.constant 0.000000e+00 : f32
    %148 = vector.broadcast %cst_62 : f32 to vector<8x128xf32>
    %149 = arith.subf %148, %103 : vector<8x128xf32>
    %cst_63 = arith.constant 0.000000e+00 : f32
    %150 = vector.broadcast %cst_63 : f32 to vector<8x128xf32>
    %151 = arith.maximumf %149, %150 : vector<8x128xf32>
    %cst_64 = arith.constant 2.000000e+01 : f32
    %152 = vector.broadcast %cst_64 : f32 to vector<8x128xf32>
    %153 = arith.subf %103, %152 : vector<8x128xf32>
    %cst_65 = arith.constant 0.000000e+00 : f32
    %154 = vector.broadcast %cst_65 : f32 to vector<8x128xf32>
    %155 = arith.maximumf %153, %154 : vector<8x128xf32>
    %156 = arith.addf %151, %155 : vector<8x128xf32>
    %cst_66 = arith.constant 1.000000e+00 : f32
    %157 = vector.broadcast %cst_66 : f32 to vector<8x128xf32>
    %158 = arith.subf %157, %112 : vector<8x128xf32>
    %cst_67 = arith.constant 0.000000e+00 : f32
    %159 = vector.broadcast %cst_67 : f32 to vector<8x128xf32>
    %160 = arith.maximumf %158, %159 : vector<8x128xf32>
    %161 = arith.addf %156, %160 : vector<8x128xf32>
    %cst_68 = arith.constant 2.500000e+01 : f32
    %162 = vector.broadcast %cst_68 : f32 to vector<8x128xf32>
    %163 = arith.subf %112, %162 : vector<8x128xf32>
    %cst_69 = arith.constant 0.000000e+00 : f32
    %164 = vector.broadcast %cst_69 : f32 to vector<8x128xf32>
    %165 = arith.maximumf %163, %164 : vector<8x128xf32>
    %166 = arith.addf %161, %165 : vector<8x128xf32>
    %167 = arith.addf %77, %166 : vector<8x128xf32>
    %168 = arith.mulf %112, %112 : vector<8x128xf32>
    %cst_70 = arith.constant 1.56130993 : f32
    %169 = vector.broadcast %cst_70 : f32 to vector<8x128xf32>
    %170 = arith.mulf %169, %168 : vector<8x128xf32>
    %cst_71 = arith.constant 9.99999997E-7 : f32
    %171 = vector.broadcast %cst_71 : f32 to vector<8x128xf32>
    %172 = arith.addf %170, %171 : vector<8x128xf32>
    %173 = tpu.reciprocal %172 {approx = true} : vector<8x128xf32> -> vector<8x128xf32>
    %174 = arith.mulf %103, %173 : vector<8x128xf32>
    %cst_72 = arith.constant 1.400000e-01 : f32
    %175 = vector.broadcast %cst_72 : f32 to vector<8x128xf32>
    %176 = arith.subf %174, %175 : vector<8x128xf32>
    %cst_73 = arith.constant 0.000000e+00 : f32
    %177 = vector.broadcast %cst_73 : f32 to vector<8x128xf32>
    %178 = arith.maximumf %176, %177 : vector<8x128xf32>
    %179 = arith.addf %89, %178 : vector<8x128xf32>
    %cst_74 = arith.constant 0.00999999977 : f32
    %180 = vector.broadcast %cst_74 : f32 to vector<8x128xf32>
    %181 = arith.subf %180, %174 : vector<8x128xf32>
    %cst_75 = arith.constant 0.000000e+00 : f32
    %182 = vector.broadcast %cst_75 : f32 to vector<8x128xf32>
    %183 = arith.maximumf %181, %182 : vector<8x128xf32>
    %184 = arith.addf %94, %183 : vector<8x128xf32>
    %185 = arith.mulf %103, %103 : vector<8x128xf32>
    %186 = arith.addf %96, %185 : vector<8x128xf32>
    %187 = arith.mulf %185, %185 : vector<8x128xf32>
    %188 = arith.addf %98, %187 : vector<8x128xf32>
    %c2_i32 = arith.constant 2 : i32
    %c0_76 = arith.constant 0 : index
    %c0_77 = arith.constant 0 : index
    %c0_78 = arith.constant 0 : index
    %189 = vector.load %arg4[%c0_76, %c0_77, %c0_78] : memref<7x8x128xf32, #tpu.memory_space<vmem>>, vector<1x8x128xf32>
    %190 = vector.shape_cast %189 : vector<1x8x128xf32> to vector<8x128xf32>
    %191 = arith.addf %190, %130 : vector<8x128xf32>
    %c0_79 = arith.constant 0 : index
    %c0_80 = arith.constant 0 : index
    %c0_81 = arith.constant 0 : index
    %192 = vector.load %arg4[%c0_79, %c0_80, %c0_81] : memref<7x8x128xf32, #tpu.memory_space<vmem>>, vector<1x8x128xf32>
    %193 = vector.shape_cast %192 : vector<1x8x128xf32> to vector<8x128xf32>
    %194 = vector.shape_cast %191 : vector<8x128xf32> to vector<1x8x128xf32>
    tpu.vector_store %arg4[%c0_79, %c0_80, %c0_81], %194 {strides = array<i32>} : memref<7x8x128xf32, #tpu.memory_space<vmem>>, vector<1x8x128xf32>,
    %c1_82 = arith.constant 1 : index
    %c0_83 = arith.constant 0 : index
    %c0_84 = arith.constant 0 : index
    %195 = vector.load %arg4[%c1_82, %c0_83, %c0_84] : memref<7x8x128xf32, #tpu.memory_space<vmem>>, vector<1x8x128xf32>
    %196 = vector.shape_cast %195 : vector<1x8x128xf32> to vector<8x128xf32>
    %197 = arith.addf %196, %136 : vector<8x128xf32>
    %c1_85 = arith.constant 1 : index
    %c0_86 = arith.constant 0 : index
    %c0_87 = arith.constant 0 : index
    %198 = vector.load %arg4[%c1_85, %c0_86, %c0_87] : memref<7x8x128xf32, #tpu.memory_space<vmem>>, vector<1x8x128xf32>
    %199 = vector.shape_cast %198 : vector<1x8x128xf32> to vector<8x128xf32>
    %200 = vector.shape_cast %197 : vector<8x128xf32> to vector<1x8x128xf32>
    tpu.vector_store %arg4[%c1_85, %c0_86, %c0_87], %200 {strides = array<i32>} : memref<7x8x128xf32, #tpu.memory_space<vmem>>, vector<1x8x128xf32>,
    %c2_88 = arith.constant 2 : index
    %c0_89 = arith.constant 0 : index
    %c0_90 = arith.constant 0 : index
    %201 = vector.load %arg4[%c2_88, %c0_89, %c0_90] : memref<7x8x128xf32, #tpu.memory_space<vmem>>, vector<1x8x128xf32>
    %202 = vector.shape_cast %201 : vector<1x8x128xf32> to vector<8x128xf32>
    %203 = arith.addf %202, %140 : vector<8x128xf32>
    %c2_91 = arith.constant 2 : index
    %c0_92 = arith.constant 0 : index
    %c0_93 = arith.constant 0 : index
    %204 = vector.load %arg4[%c2_91, %c0_92, %c0_93] : memref<7x8x128xf32, #tpu.memory_space<vmem>>, vector<1x8x128xf32>
    %205 = vector.shape_cast %204 : vector<1x8x128xf32> to vector<8x128xf32>
    %206 = vector.shape_cast %203 : vector<8x128xf32> to vector<1x8x128xf32>
    tpu.vector_store %arg4[%c2_91, %c0_92, %c0_93], %206 {strides = array<i32>} : memref<7x8x128xf32, #tpu.memory_space<vmem>>, vector<1x8x128xf32>,
    %c3_94 = arith.constant 3 : index
    %c0_95 = arith.constant 0 : index
    %c0_96 = arith.constant 0 : index
    %207 = vector.load %arg4[%c3_94, %c0_95, %c0_96] : memref<7x8x128xf32, #tpu.memory_space<vmem>>, vector<1x8x128xf32>
    %208 = vector.shape_cast %207 : vector<1x8x128xf32> to vector<8x128xf32>
    %209 = arith.addf %208, %147 : vector<8x128xf32>
    %c3_97 = arith.constant 3 : index
    %c0_98 = arith.constant 0 : index
    %c0_99 = arith.constant 0 : index
    %210 = vector.load %arg4[%c3_97, %c0_98, %c0_99] : memref<7x8x128xf32, #tpu.memory_space<vmem>>, vector<1x8x128xf32>
    %211 = vector.shape_cast %210 : vector<1x8x128xf32> to vector<8x128xf32>
    %212 = vector.shape_cast %209 : vector<8x128xf32> to vector<1x8x128xf32>
    tpu.vector_store %arg4[%c3_97, %c0_98, %c0_99], %212 {strides = array<i32>} : memref<7x8x128xf32, #tpu.memory_space<vmem>>, vector<1x8x128xf32>,
    %c4_100 = arith.constant 4 : index
    %c0_101 = arith.constant 0 : index
    %c0_102 = arith.constant 0 : index
    %213 = vector.load %arg4[%c4_100, %c0_101, %c0_102] : memref<7x8x128xf32, #tpu.memory_space<vmem>>, vector<1x8x128xf32>
    %214 = vector.shape_cast %213 : vector<1x8x128xf32> to vector<8x128xf32>
    %215 = arith.addf %214, %167 : vector<8x128xf32>
    %c4_103 = arith.constant 4 : index
    %c0_104 = arith.constant 0 : index
    %c0_105 = arith.constant 0 : index
    %216 = vector.load %arg4[%c4_103, %c0_104, %c0_105] : memref<7x8x128xf32, #tpu.memory_space<vmem>>, vector<1x8x128xf32>
    %217 = vector.shape_cast %216 : vector<1x8x128xf32> to vector<8x128xf32>
    %218 = vector.shape_cast %215 : vector<8x128xf32> to vector<1x8x128xf32>
    tpu.vector_store %arg4[%c4_103, %c0_104, %c0_105], %218 {strides = array<i32>} : memref<7x8x128xf32, #tpu.memory_space<vmem>>, vector<1x8x128xf32>,
    %c5_106 = arith.constant 5 : index
    %c0_107 = arith.constant 0 : index
    %c0_108 = arith.constant 0 : index
    %219 = vector.load %arg4[%c5_106, %c0_107, %c0_108] : memref<7x8x128xf32, #tpu.memory_space<vmem>>, vector<1x8x128xf32>
    %220 = vector.shape_cast %219 : vector<1x8x128xf32> to vector<8x128xf32>
    %221 = arith.addf %220, %179 : vector<8x128xf32>
    %c5_109 = arith.constant 5 : index
    %c0_110 = arith.constant 0 : index
    %c0_111 = arith.constant 0 : index
    %222 = vector.load %arg4[%c5_109, %c0_110, %c0_111] : memref<7x8x128xf32, #tpu.memory_space<vmem>>, vector<1x8x128xf32>
    %223 = vector.shape_cast %222 : vector<1x8x128xf32> to vector<8x128xf32>
    %224 = vector.shape_cast %221 : vector<8x128xf32> to vector<1x8x128xf32>
    tpu.vector_store %arg4[%c5_109, %c0_110, %c0_111], %224 {strides = array<i32>} : memref<7x8x128xf32, #tpu.memory_space<vmem>>, vector<1x8x128xf32>,
    %c6_112 = arith.constant 6 : index
    %c0_113 = arith.constant 0 : index
    %c0_114 = arith.constant 0 : index
    %225 = vector.load %arg4[%c6_112, %c0_113, %c0_114] : memref<7x8x128xf32, #tpu.memory_space<vmem>>, vector<1x8x128xf32>
    %226 = vector.shape_cast %225 : vector<1x8x128xf32> to vector<8x128xf32>
    %227 = arith.addf %226, %184 : vector<8x128xf32>
    %c6_115 = arith.constant 6 : index
    %c0_116 = arith.constant 0 : index
    %c0_117 = arith.constant 0 : index
    %228 = vector.load %arg4[%c6_115, %c0_116, %c0_117] : memref<7x8x128xf32, #tpu.memory_space<vmem>>, vector<1x8x128xf32>
    %229 = vector.shape_cast %228 : vector<1x8x128xf32> to vector<8x128xf32>
    %230 = vector.shape_cast %227 : vector<8x128xf32> to vector<1x8x128xf32>
    tpu.vector_store %arg4[%c6_115, %c0_116, %c0_117], %230 {strides = array<i32>} : memref<7x8x128xf32, #tpu.memory_space<vmem>>, vector<1x8x128xf32>,
    %c0_118 = arith.constant 0 : index
    %c0_119 = arith.constant 0 : index
    %c0_120 = arith.constant 0 : index
    %231 = vector.load %arg5[%c0_118, %c0_119, %c0_120] : memref<2x8x128xf32, #tpu.memory_space<vmem>>, vector<1x8x128xf32>
    %232 = vector.shape_cast %231 : vector<1x8x128xf32> to vector<8x128xf32>
    %233 = arith.addf %232, %186 : vector<8x128xf32>
    %c0_121 = arith.constant 0 : index
    %c0_122 = arith.constant 0 : index
    %c0_123 = arith.constant 0 : index
    %234 = vector.load %arg5[%c0_121, %c0_122, %c0_123] : memref<2x8x128xf32, #tpu.memory_space<vmem>>, vector<1x8x128xf32>
    %235 = vector.shape_cast %234 : vector<1x8x128xf32> to vector<8x128xf32>
    %236 = vector.shape_cast %233 : vector<8x128xf32> to vector<1x8x128xf32>
    tpu.vector_store %arg5[%c0_121, %c0_122, %c0_123], %236 {strides = array<i32>} : memref<2x8x128xf32, #tpu.memory_space<vmem>>, vector<1x8x128xf32>,
    %c1_124 = arith.constant 1 : index
    %c0_125 = arith.constant 0 : index
    %c0_126 = arith.constant 0 : index
    %237 = vector.load %arg5[%c1_124, %c0_125, %c0_126] : memref<2x8x128xf32, #tpu.memory_space<vmem>>, vector<1x8x128xf32>
    %238 = vector.shape_cast %237 : vector<1x8x128xf32> to vector<8x128xf32>
    %239 = arith.addf %238, %188 : vector<8x128xf32>
    %c1_127 = arith.constant 1 : index
    %c0_128 = arith.constant 0 : index
    %c0_129 = arith.constant 0 : index
    %240 = vector.load %arg5[%c1_127, %c0_128, %c0_129] : memref<2x8x128xf32, #tpu.memory_space<vmem>>, vector<1x8x128xf32>
    %241 = vector.shape_cast %240 : vector<1x8x128xf32> to vector<8x128xf32>
    %242 = vector.shape_cast %239 : vector<8x128xf32> to vector<1x8x128xf32>
    tpu.vector_store %arg5[%c1_127, %c0_128, %c0_129], %242 {strides = array<i32>} : memref<2x8x128xf32, #tpu.memory_space<vmem>>, vector<1x8x128xf32>,
    %c2_i32_130 = arith.constant 2 : i32
    %243 = arith.cmpi eq, %arg1, %c2_i32_130 : i32
    %244 = arith.extui %243 : i1 to i32
    %c0_i32_131 = arith.constant 0 : i32
    %245 = arith.cmpi ne, %244, %c0_i32_131 : i32
    scf.if %245 {
      %c0_135 = arith.constant 0 : index
      %c0_136 = arith.constant 0 : index
      %c0_137 = arith.constant 0 : index
      %251 = vector.load %arg5[%c0_135, %c0_136, %c0_137] : memref<2x8x128xf32, #tpu.memory_space<vmem>>, vector<1x8x128xf32>
      %252 = vector.shape_cast %251 : vector<1x8x128xf32> to vector<8x128xf32>
      %253 = vector.shape_cast %252 : vector<8x128xf32> to vector<1x8x128xf32>
      %cst_138 = arith.constant dense<0.000000e+00> : vector<1xf32>
      %254 = vector.multi_reduction <add>, %253, %cst_138 [1, 2] : vector<1x8x128xf32> to vector<1xf32>
      %255 = vector.shape_cast %254 : vector<1xf32> to vector<1x1x1xf32>
      %256 = vector.extract %255[0, 0, 0] : f32 from vector<1x1x1xf32>
      %c1_139 = arith.constant 1 : index
      %c0_140 = arith.constant 0 : index
      %c0_141 = arith.constant 0 : index
      %257 = vector.load %arg5[%c1_139, %c0_140, %c0_141] : memref<2x8x128xf32, #tpu.memory_space<vmem>>, vector<1x8x128xf32>
      %258 = vector.shape_cast %257 : vector<1x8x128xf32> to vector<8x128xf32>
      %259 = vector.shape_cast %258 : vector<8x128xf32> to vector<1x8x128xf32>
      %cst_142 = arith.constant dense<0.000000e+00> : vector<1xf32>
      %260 = vector.multi_reduction <add>, %259, %cst_142 [1, 2] : vector<1x8x128xf32> to vector<1xf32>
      %261 = vector.shape_cast %260 : vector<1xf32> to vector<1x1x1xf32>
      %262 = vector.extract %261[0, 0, 0] : f32 from vector<1x1x1xf32>
      %263 = arith.mulf %256, %256 : f32
      %cst_143 = arith.constant 1.66666665E-4 : f32
      %264 = arith.mulf %263, %cst_143 : f32
      %265 = arith.subf %262, %264 : f32
      %cst_144 = arith.constant 1.66694444E-4 : f32
      %266 = arith.mulf %265, %cst_144 : f32
      %c0_145 = arith.constant 0 : index
      %267 = memref.load %arg6[%c0_145] : memref<1xf32, #tpu.memory_space<smem>>
      %cst_146 = arith.constant 1579813.38 : f32
      %268 = arith.mulf %cst_146, %266 : f32
      %269 = arith.addf %267, %268 : f32
      %c0_147 = arith.constant 0 : index
      %270 = memref.load %arg6[%c0_147] : memref<1xf32, #tpu.memory_space<smem>>
      memref.store %269, %arg6[%c0_147] : memref<1xf32, #tpu.memory_space<smem>>
    } else {
    }
    %c1_i32_132 = arith.constant 1 : i32
    %246 = arith.cmpi eq, %arg0, %c1_i32_132 : i32
    %c2_i32_133 = arith.constant 2 : i32
    %247 = arith.cmpi eq, %arg1, %c2_i32_133 : i32
    %248 = arith.andi %246, %247 : i1
    %249 = arith.extui %248 : i1 to i32
    %c0_i32_134 = arith.constant 0 : i32
    %250 = arith.cmpi ne, %249, %c0_i32_134 : i32
    scf.if %250 {
      %c0_135 = arith.constant 0 : index
      %c0_136 = arith.constant 0 : index
      %c0_137 = arith.constant 0 : index
      %251 = vector.load %arg4[%c0_135, %c0_136, %c0_137] : memref<7x8x128xf32, #tpu.memory_space<vmem>>, vector<1x8x128xf32>
      %252 = vector.shape_cast %251 : vector<1x8x128xf32> to vector<8x128xf32>
      %253 = vector.shape_cast %252 : vector<8x128xf32> to vector<1x8x128xf32>
      %cst_138 = arith.constant dense<0.000000e+00> : vector<1xf32>
      %254 = vector.multi_reduction <add>, %253, %cst_138 [1, 2] : vector<1x8x128xf32> to vector<1xf32>
      %255 = vector.shape_cast %254 : vector<1xf32> to vector<1x1x1xf32>
      %256 = vector.extract %255[0, 0, 0] : f32 from vector<1x1x1xf32>
      %cst_139 = arith.constant 8.33333324E-5 : f32
      %257 = arith.mulf %256, %cst_139 : f32
      %c1_140 = arith.constant 1 : index
      %c0_141 = arith.constant 0 : index
      %c0_142 = arith.constant 0 : index
      %258 = vector.load %arg4[%c1_140, %c0_141, %c0_142] : memref<7x8x128xf32, #tpu.memory_space<vmem>>, vector<1x8x128xf32>
      %259 = vector.shape_cast %258 : vector<1x8x128xf32> to vector<8x128xf32>
      %260 = vector.shape_cast %259 : vector<8x128xf32> to vector<1x8x128xf32>
      %cst_143 = arith.constant dense<0.000000e+00> : vector<1xf32>
      %261 = vector.multi_reduction <add>, %260, %cst_143 [1, 2] : vector<1x8x128xf32> to vector<1xf32>
      %262 = vector.shape_cast %261 : vector<1xf32> to vector<1x1x1xf32>
      %263 = vector.extract %262[0, 0, 0] : f32 from vector<1x1x1xf32>
      %cst_144 = arith.constant 8.33333324E-5 : f32
      %264 = arith.mulf %263, %cst_144 : f32
      %c2_145 = arith.constant 2 : index
      %c0_146 = arith.constant 0 : index
      %c0_147 = arith.constant 0 : index
      %265 = vector.load %arg4[%c2_145, %c0_146, %c0_147] : memref<7x8x128xf32, #tpu.memory_space<vmem>>, vector<1x8x128xf32>
      %266 = vector.shape_cast %265 : vector<1x8x128xf32> to vector<8x128xf32>
      %267 = vector.shape_cast %266 : vector<8x128xf32> to vector<1x8x128xf32>
      %cst_148 = arith.constant dense<0.000000e+00> : vector<1xf32>
      %268 = vector.multi_reduction <add>, %267, %cst_148 [1, 2] : vector<1x8x128xf32> to vector<1xf32>
      %269 = vector.shape_cast %268 : vector<1xf32> to vector<1x1x1xf32>
      %270 = vector.extract %269[0, 0, 0] : f32 from vector<1x1x1xf32>
      %cst_149 = arith.constant 8.33333324E-5 : f32
      %271 = arith.mulf %270, %cst_149 : f32
      %cst_150 = arith.constant 1.000000e+00 : f32
      %272 = arith.subf %cst_150, %271 : f32
      %c3_151 = arith.constant 3 : index
      %c0_152 = arith.constant 0 : index
      %c0_153 = arith.constant 0 : index
      %273 = vector.load %arg4[%c3_151, %c0_152, %c0_153] : memref<7x8x128xf32, #tpu.memory_space<vmem>>, vector<1x8x128xf32>
      %274 = vector.shape_cast %273 : vector<1x8x128xf32> to vector<8x128xf32>
      %275 = vector.shape_cast %274 : vector<8x128xf32> to vector<1x8x128xf32>
      %cst_154 = arith.constant dense<0.000000e+00> : vector<1xf32>
      %276 = vector.multi_reduction <add>, %275, %cst_154 [1, 2] : vector<1x8x128xf32> to vector<1xf32>
      %277 = vector.shape_cast %276 : vector<1xf32> to vector<1x1x1xf32>
      %278 = vector.extract %277[0, 0, 0] : f32 from vector<1x1x1xf32>
      %cst_155 = arith.constant 2.880000e+02 : f32
      %279 = arith.subf %278, %cst_155 : f32
      %cst_156 = arith.constant 8.33333324E-5 : f32
      %280 = arith.mulf %279, %cst_156 : f32
      %c4_157 = arith.constant 4 : index
      %c0_158 = arith.constant 0 : index
      %c0_159 = arith.constant 0 : index
      %281 = vector.load %arg4[%c4_157, %c0_158, %c0_159] : memref<7x8x128xf32, #tpu.memory_space<vmem>>, vector<1x8x128xf32>
      %282 = vector.shape_cast %281 : vector<1x8x128xf32> to vector<8x128xf32>
      %283 = vector.shape_cast %282 : vector<8x128xf32> to vector<1x8x128xf32>
      %cst_160 = arith.constant dense<0.000000e+00> : vector<1xf32>
      %284 = vector.multi_reduction <add>, %283, %cst_160 [1, 2] : vector<1x8x128xf32> to vector<1xf32>
      %285 = vector.shape_cast %284 : vector<1xf32> to vector<1x1x1xf32>
      %286 = vector.extract %285[0, 0, 0] : f32 from vector<1x1x1xf32>
      %cst_161 = arith.constant 2.880000e+02 : f32
      %287 = arith.subf %286, %cst_161 : f32
      %cst_162 = arith.constant 8.33333324E-5 : f32
      %288 = arith.mulf %287, %cst_162 : f32
      %c5_163 = arith.constant 5 : index
      %c0_164 = arith.constant 0 : index
      %c0_165 = arith.constant 0 : index
      %289 = vector.load %arg4[%c5_163, %c0_164, %c0_165] : memref<7x8x128xf32, #tpu.memory_space<vmem>>, vector<1x8x128xf32>
      %290 = vector.shape_cast %289 : vector<1x8x128xf32> to vector<8x128xf32>
      %291 = vector.shape_cast %290 : vector<8x128xf32> to vector<1x8x128xf32>
      %cst_166 = arith.constant dense<0.000000e+00> : vector<1xf32>
      %292 = vector.multi_reduction <add>, %291, %cst_166 [1, 2] : vector<1x8x128xf32> to vector<1xf32>
      %293 = vector.shape_cast %292 : vector<1xf32> to vector<1x1x1xf32>
      %294 = vector.extract %293[0, 0, 0] : f32 from vector<1x1x1xf32>
      %cst_167 = arith.constant 8.33333324E-5 : f32
      %295 = arith.mulf %294, %cst_167 : f32
      %c6_168 = arith.constant 6 : index
      %c0_169 = arith.constant 0 : index
      %c0_170 = arith.constant 0 : index
      %296 = vector.load %arg4[%c6_168, %c0_169, %c0_170] : memref<7x8x128xf32, #tpu.memory_space<vmem>>, vector<1x8x128xf32>
      %297 = vector.shape_cast %296 : vector<1x8x128xf32> to vector<8x128xf32>
      %298 = vector.shape_cast %297 : vector<8x128xf32> to vector<1x8x128xf32>
      %cst_171 = arith.constant dense<0.000000e+00> : vector<1xf32>
      %299 = vector.multi_reduction <add>, %298, %cst_171 [1, 2] : vector<1x8x128xf32> to vector<1xf32>
      %300 = vector.shape_cast %299 : vector<1xf32> to vector<1x1x1xf32>
      %301 = vector.extract %300[0, 0, 0] : f32 from vector<1x1x1xf32>
      %cst_172 = arith.constant 2.880000e+00 : f32
      %302 = arith.subf %301, %cst_172 : f32
      %cst_173 = arith.constant 8.33333324E-5 : f32
      %303 = arith.mulf %302, %cst_173 : f32
      %cst_174 = arith.constant 1.000000e+00 : f32
      %304 = arith.mulf %cst_174, %257 : f32
      %305 = arith.addf %264, %272 : f32
      %cst_175 = arith.constant 1.000000e+00 : f32
      %306 = arith.mulf %cst_175, %305 : f32
      %307 = arith.addf %304, %306 : f32
      %cst_176 = arith.constant 1.000000e-01 : f32
      %308 = arith.mulf %cst_176, %280 : f32
      %309 = arith.addf %307, %308 : f32
      %310 = arith.addf %288, %280 : f32
      %311 = arith.addf %310, %295 : f32
      %c0_177 = arith.constant 0 : index
      %312 = memref.load %arg6[%c0_177] : memref<1xf32, #tpu.memory_space<smem>>
      %cst_178 = arith.constant 5.000000e-01 : f32
      %313 = arith.mulf %312, %cst_178 : f32
      %314 = arith.addf %303, %295 : f32
      %cst_179 = arith.constant 1.000000e-01 : f32
      %315 = arith.mulf %cst_179, %311 : f32
      %316 = arith.addf %309, %315 : f32
      %cst_180 = arith.constant 5.000000e-02 : f32
      %317 = arith.mulf %cst_180, %313 : f32
      %318 = arith.addf %316, %317 : f32
      %cst_181 = arith.constant 1.000000e-01 : f32
      %319 = arith.mulf %cst_181, %314 : f32
      %320 = arith.addf %318, %319 : f32
      %c0_182 = arith.constant 0 : index
      %321 = memref.load %arg3[%c0_182] : memref<8xf32, #tpu.memory_space<smem>>
      memref.store %320, %arg3[%c0_182] : memref<8xf32, #tpu.memory_space<smem>>
      %c1_183 = arith.constant 1 : index
      %322 = memref.load %arg3[%c1_183] : memref<8xf32, #tpu.memory_space<smem>>
      memref.store %309, %arg3[%c1_183] : memref<8xf32, #tpu.memory_space<smem>>
      %c2_184 = arith.constant 2 : index
      %323 = memref.load %arg3[%c2_184] : memref<8xf32, #tpu.memory_space<smem>>
      memref.store %264, %arg3[%c2_184] : memref<8xf32, #tpu.memory_space<smem>>
      %c3_185 = arith.constant 3 : index
      %324 = memref.load %arg3[%c3_185] : memref<8xf32, #tpu.memory_space<smem>>
      memref.store %272, %arg3[%c3_185] : memref<8xf32, #tpu.memory_space<smem>>
      %c4_186 = arith.constant 4 : index
      %325 = memref.load %arg3[%c4_186] : memref<8xf32, #tpu.memory_space<smem>>
      memref.store %311, %arg3[%c4_186] : memref<8xf32, #tpu.memory_space<smem>>
      %c5_187 = arith.constant 5 : index
      %326 = memref.load %arg3[%c5_187] : memref<8xf32, #tpu.memory_space<smem>>
      memref.store %313, %arg3[%c5_187] : memref<8xf32, #tpu.memory_space<smem>>
      %c6_188 = arith.constant 6 : index
      %327 = memref.load %arg3[%c6_188] : memref<8xf32, #tpu.memory_space<smem>>
      memref.store %314, %arg3[%c6_188] : memref<8xf32, #tpu.memory_space<smem>>
      %cst_189 = arith.constant 0.000000e+00 : f32
      %c7_190 = arith.constant 7 : index
      %328 = memref.load %arg3[%c7_190] : memref<8xf32, #tpu.memory_space<smem>>
      memref.store %cst_189, %arg3[%c7_190] : memref<8xf32, #tpu.memory_space<smem>>
    } else {
    }
    return
  }
  func.func @transform_0(%arg0: i32, %arg1: i32) -> (i32, i32, i32, i32) {
    %c0_i32 = arith.constant 0 : i32
    %c0_i32_0 = arith.constant 0 : i32
    %c0_i32_1 = arith.constant 0 : i32
    return %c0_i32, %arg0, %arg1, %c0_i32_0 : i32, i32, i32, i32
  }
  func.func @transform_1(%arg0: i32, %arg1: i32) -> i32 {
    %c0_i32 = arith.constant 0 : i32
    %c0_i32_0 = arith.constant 0 : i32
    return %c0_i32 : i32
  }
}

</mosaic_0001>

<llo_original>
// kernel: tpu_custom_call.1
$region0: #{tpu_custom_call.1}
  #allocation0 [shape = 'u32[]', space=smem, size = 0x4, offset = 0x4, fixed_abs, tag = 'smem constant byte address 0x4 - core index']
  #allocation1 [shape = 'u32[72,128]{1,0:T(1,128)}', space=vmem, size = 0x9000, scoped, tag = 'internal scratch']
  #allocation2 [shape = 'f32[7,8,128]{2,1,0:T(8,128)}', space=vmem, size = 0x7000, scoped, tag = 'scratch operand']
  #allocation3 [shape = 'f32[2,8,128]{2,1,0:T(8,128)}', space=vmem, size = 0x2000, scoped, tag = 'scratch operand']
  #allocation4 [shape = 'f32[1]{0:T(128)}', space=smem, size = 0x200, scoped, tag = 'scratch operand']
  #allocation9 [shape = 's32[]', space=sflag, size = 0x4, offset = 0, fixed_abs, tag = 'sflag constant byte address 0x0 - dummy sync flag']
  %s0 = inlined_call_operand.hbm [shape: f32[8,2,48,128], index: 0, kind: input, shape index: {}]
  %s1 = inlined_call_operand.hbm [shape: f32[8], index: 1, kind: output, shape index: {}]
  %s2 = sld [smem:[#allocation0]]
  $region57: #{tpu_custom_call.1} parent=0
    _
  %s4 = ssub.s32 1, %s2
  %s5 = scalar_select 0, %s4, %s2
  $region1: #{tpu_custom_call.1} parent=0
    #allocation5 [shape = 'u8[131072]{0}', space=vmem, size = 0x20000, scoped, tag = 'input window, operand 0']
    #allocation6 [shape = 's32[2]{0}', space=sflag, size = 0x8, scoped, tag = 'scoped memory for tpu_custom_call.1']
    #allocation7 [shape = 's32[2]{0}', space=sflag, size = 0x8, scoped, tag = 'scoped memory for tpu_custom_call.1']
    #allocation8 [shape = 'u8[512]{0}', space=smem, size = 0x200, scoped, tag = 'output window, operand 0, single buffered']
    %6 = vsyncpa [#allocation6], 0
    %s7 = scalar_lea.sflag [#allocation6], 1
    %8 = vsyncpa %s7, 0
    %9 = vsyncpa [#allocation7], 0
    loop: start=0, step=1, limit=8
    $region2: #{tpu_custom_call.1} parent=1 // loop_pre_header
      _
    $region3: #{tpu_custom_call.1} parent=1 // loop_header
      %s11 = sphi 0, %s15
      %p12 = scmp.ge.s32.totalorder %s11, 8
      %s18 = sphi 0, %s30
      %s19 = sphi 0, %s26
      %s20 = sphi 0, %s18
      %s21 = sphi 0, %s19
      %s22 = sphi 0, %s20
      %s23 = sphi 0, %s21
      %s35 = sphi 0, %s37
      %s38 = sphi 0, %s35
      %s39 = sphi 0, %s38
      %s55 = sphi 0, %s39
      %s59 = sphi 0, %s59
      %s61 = sphi 0, %s59
      %s62 = sphi 0, %s61
      %s76 = sphi 0, %s62
    $region4: #{tpu_custom_call.1} parent=1 // loop_header_branch
      %14 = sbr.rel (%p12) target = $region8
    $region5: #{tpu_custom_call.1} parent=1 // loop_body
      %s16 = ssub.s32 %s11, 1
      %s17 = ssub.s32 %s11, 2
      %s24 = sadd.s32 1, %s19
      %p25 = scmp.ge.s32.totalorder %s24, 3
      %s26 = scalar_select %p25, 0, %s24
      %s27 = sadd.s32 1, %s18
      %s28 = scalar_select %p25, %s27, %s18
      %p29 = scmp.ge.s32.totalorder %s28, 2
      %s30 = scalar_select %p29, 0, %s28
      %s31 = ssub.s32 %s18, %s30
      %s32 = ssub.s32 %s19, %s26
      %s33 = sor.u32 %s31, %s32
      %p34 = scmp.eq.s32.totalorder %s33, 0
      %s36 = sadd.s32 %s35, 1
      %s37 = scalar_select %p34, %s35, %s36
      %p40 = pneg %p34
      %p41 = scmp.eq.s32.totalorder %s11, 5
      %p42 = por %p40, %p41
      %p43 = scmp.ne.s32.totalorder %s35, %s38
      %p44 = scmp.eq.s32.totalorder %s11, 0
      %p45 = por %p43, %p44
      %p46 = scmp.ne.s32.totalorder %s35, %s38
      %p47 = scmp.eq.s32.totalorder %s16, 5
      %p48 = por %p46, %p47
      %p49 = scmp.ne.s32.totalorder %s38, %s39
      %p50 = scmp.eq.s32.totalorder %s16, 0
      %p51 = por %p49, %p50
      %p52 = scmp.ne.s32.totalorder %s38, %s39
      %p53 = scmp.eq.s32.totalorder %s17, 5
      %p54 = por %p52, %p53
      %p56 = scmp.ne.s32.totalorder %s39, %s55
      %p57 = scmp.eq.s32.totalorder %s17, 0
      %p58 = por %p56, %p57
      %s60 = sadd.s32 %s59, 1
      %p63 = scmp.eq.s32.totalorder %s11, 5
      %p64 = scmp.ne.s32.totalorder %s59, %s61
      %p65 = scmp.eq.s32.totalorder %s11, 0
      %p66 = por %p64, %p65
      %p67 = scmp.ne.s32.totalorder %s59, %s61
      %p68 = scmp.eq.s32.totalorder %s16, 5
      %p69 = por %p67, %p68
      %p70 = scmp.ne.s32.totalorder %s61, %s62
      %p71 = scmp.eq.s32.totalorder %s16, 0
      %p72 = por %p70, %p71
      %p73 = scmp.ne.s32.totalorder %s61, %s62
      %p74 = scmp.eq.s32.totalorder %s17, 5
      %p75 = por %p73, %p74
      %p77 = scmp.ne.s32.totalorder %s62, %s76
      %p78 = scmp.eq.s32.totalorder %s17, 0
      %p79 = por %p77, %p78
      %p80 = scmp.le.s32.totalorder 1, %s11
      %p81 = scmp.lt.s32.totalorder %s11, 7
      %p82 = pnand %p80, %p81
      %p83 = pneg %p82
      // Predicated region
      $region9: #{tpu_custom_call.1} parent=5 // pred_check
        _
      $region10: #{tpu_custom_call.1} parent=5 // pred_check_branch
        %85 = sbr.rel (%p82) target = $region12
      $region11: #{tpu_custom_call.1} parent=5 // pred_region
        %s86 = ssub.s32 %s11, 1
      $region12: #{tpu_custom_call.1} parent=5 // pred_fallthru
        _
      %p87 = scmp.lt.s32.totalorder %s11, 6
      // Predicated region
      $region13: #{tpu_custom_call.1} parent=5 // pred_check
        %p88 = pneg %p87
      $region14: #{tpu_custom_call.1} parent=5 // pred_check_branch
        %90 = sbr.rel (%p88) target = $region16
      $region15: #{tpu_custom_call.1} parent=5 // pred_region
        // Predicated region
        $region17: #{tpu_custom_call.1} parent=15 // pred_check
          %p91 = pneg %p45
        $region18: #{tpu_custom_call.1} parent=15 // pred_check_branch
          %93 = sbr.rel (%p91) target = $region20
        $region19: #{tpu_custom_call.1} parent=15 // pred_region
          #allocation10 [shape = 'u32[6]{0}', space=smem, size = 0x18, scoped, tag = 'DMA stride descriptor']
          %s94 = sand.u32 %s35, 1
          %s95 = scalar_lea.sflag [#allocation6], %s94
          %s96 = sand.u32 %s35, 1
          %s97 = smul.addr %s96, 128
          %s98 = scalar_lea.vmem [#allocation5], %s97
          %s99 = smul.u32 2, %s19
          %101 = vsyncadd %s95, 0
          %s102 = smul.addr %s18, 6
          %s103 = sadd.s32 %s99, %s102
          %s104 = smul.addr %s103, 8
          %s105 = scalar_lea.hbm %s0, %s104
          %s107 = sshll.u32 1, 14
          %s108 = sxor.u32 4294967295, %s107
          %s110 = sld [smem:[#allocation0]]
          %s111 = sadd.s32 2, %s110
          %s113 = sshll.u32 7, 26
          %s114 = sxor.u32 4294967295, %s113
          %s115 = sand.u32 0, %s114
          %s116 = sshll.u32 %s111, 26
          %s117 = sor.u32 %s115, %s116
          %s118 = sshll.u32 %s105, 4
          %s119 = int_to_ptr.hbm [resolvable:$true] %s118
          %s120 = sshll.u32 %s98, 4
          %s121 = int_to_ptr.vmem [resolvable:$true] %s120
          %127 = sst [smem:[#allocation10]] 1536
          %s128 = scalar_lea.smem [#allocation10], 1
          %129 = sst [smem:[%s128]] 256
          %s130 = scalar_lea.smem [#allocation10], 2
          %131 = sst [smem:[%s130]] 2
          %s132 = scalar_lea.smem [#allocation10], 3
          %133 = sst [smem:[%s132]] 128
          %s134 = scalar_lea.smem [#allocation10], 4
          %135 = sst [smem:[%s134]] 128
          %s136 = scalar_lea.smem [#allocation10], 5
          %137 = sst [smem:[%s136]] 8
          %139 = dma.general %s119, 2048, %s121, %s95, [#allocation9], [#allocation10], %s117, 0
        $region20: #{tpu_custom_call.1} parent=15 // pred_fallthru
          _
      $region16: #{tpu_custom_call.1} parent=5 // pred_fallthru
        _
      %p140 = scmp.le.s32.totalorder 1, %s11
      %p141 = scmp.lt.s32.totalorder %s11, 7
      %p142 = pnand %p140, %p141
      %p143 = pneg %p142
      // Predicated region
      $region21: #{tpu_custom_call.1} parent=5 // pred_check
        _
      $region22: #{tpu_custom_call.1} parent=5 // pred_check_branch
        %145 = sbr.rel (%p142) target = $region24
      $region23: #{tpu_custom_call.1} parent=5 // pred_region
        %s146 = ssub.s32 %s11, 1
        %s147 = sand.u32 %s38, 1
        %s148 = scalar_lea.sflag [#allocation6], %s147
        %s149 = sand.u32 %s38, 1
        %s150 = smul.addr %s149, 128
        %s151 = scalar_lea.vmem [#allocation5], %s150
        // Predicated region
        $region25: #{tpu_custom_call.1} parent=23 // pred_check
          %p152 = pneg %p51
        $region26: #{tpu_custom_call.1} parent=23 // pred_check_branch
          %154 = sbr.rel (%p152) target = $region28
        $region27: #{tpu_custom_call.1} parent=23 // pred_region
          %156 = dma.done %s148, 2048
        $region28: #{tpu_custom_call.1} parent=23 // pred_fallthru
          _
        %s157 = sand.u32 %s38, 1
        %s158 = scalar_lea.sflag [#allocation6], %s157
        %s159 = sand.u32 %s38, 1
        %s160 = smul.addr %s159, 128
        %s161 = scalar_lea.vmem [#allocation5], %s160
        %p162 = pneg %p51
        %p163 = pneg %p48
        %p164 = pneg %p72
        %p165 = pneg %p69
        %s166 = smul.u32 2, %s21
        %p167 = scmp.eq.s32.totalorder %s20, 0
        %p168 = scmp.eq.s32.totalorder %s21, 0
        %p169 = pnand %p167, %p168
        %p170 = pneg %p169
        // Predicated region
        $region29: #{tpu_custom_call.1} parent=23 // pred_check
          _
        $region30: #{tpu_custom_call.1} parent=23 // pred_check_branch
          %172 = sbr.rel (%p169) target = $region32
        $region31: #{tpu_custom_call.1} parent=23 // pred_region
          %173 = vst [vmem:[#allocation2] sm:$0xff] 0.0
          %174 = vst [vmem:[#allocation2 + $0x8] sm:$0xff] 0.0
          %175 = vst [vmem:[#allocation2 + $0x10] sm:$0xff] 0.0
          %176 = vst [vmem:[#allocation2 + $0x18] sm:$0xff] 0.0
          %177 = vst [vmem:[#allocation2 + $0x20] sm:$0xff] 0.0
          %178 = vst [vmem:[#allocation2 + $0x28] sm:$0xff] 0.0
          %179 = vst [vmem:[#allocation2 + $0x30] sm:$0xff] 0.0
          %s180 = scalar_lea.smem [#allocation4], 0
          %181 = sst [smem:[%s180]] 0.0
        $region32: #{tpu_custom_call.1} parent=23 // pred_fallthru
          _
        // Predicated region
        $region33: #{tpu_custom_call.1} parent=23 // pred_check
          %p182 = pneg %p168
        $region34: #{tpu_custom_call.1} parent=23 // pred_check_branch
          %184 = sbr.rel (%p182) target = $region36
        $region35: #{tpu_custom_call.1} parent=23 // pred_region
          %185 = vst [vmem:[#allocation3] sm:$0xff] 0.0
          %186 = vst [vmem:[#allocation3 + $0x8] sm:$0xff] 0.0
        $region36: #{tpu_custom_call.1} parent=23 // pred_fallthru
          _
        %v187 = vld [vmem:[%s151] sm:$0xff]
        %s188 = sadd.s32 0, 16
        %s189 = scalar_lea.vmem %s151, %s188 [#allocation5]
        %v190 = vld [vmem:[%s189] sm:$0xff]
        %s191 = sadd.s32 0, 32
        %s192 = scalar_lea.vmem %s151, %s191 [#allocation5]
        %v193 = vld [vmem:[%s192] sm:$0xff]
        %s194 = sadd.s32 0, 48
        %s195 = scalar_lea.vmem %s151, %s194 [#allocation5]
        %v196 = vld [vmem:[%s195] sm:$0xff]
        %s197 = sadd.s32 0, 64
        %s198 = scalar_lea.vmem %s151, %s197 [#allocation5]
        %v199 = vld [vmem:[%s198] sm:$0xff]
        %s200 = sadd.s32 0, 80
        %s201 = scalar_lea.vmem %s151, %s200 [#allocation5]
        %v202 = vld [vmem:[%s201] sm:$0xff]
        %s203 = sadd.s32 0, 96
        %s204 = scalar_lea.vmem %s151, %s203 [#allocation5]
        %v205 = vld [vmem:[%s204] sm:$0xff]
        %s206 = sadd.s32 0, 112
        %s207 = scalar_lea.vmem %s151, %s206 [#allocation5]
        %v208 = vld [vmem:[%s207] sm:$0xff]
        %v209 = vsub.f32 %v187, %v199
        %v210 = vmul.f32 %v209, %v209
        %v211 = vadd.f32 %v210, 0.0
        %v212 = vsub.f32 %v196, %v208
        %v213 = vmul.f32 %v212, %v212
        %v214 = vadd.f32 %v211, %v213
        %v215 = vsub.f32 %v190, %v202
        %v216 = vmul.f32 %v215, %v215
        %v217 = vadd.f32 %v216, 0.0
        %v218 = vsub.f32 %v193, %v205
        %v219 = vmul.f32 %v218, %v218
        %v220 = vadd.f32 %v217, %v219
        %v221 = vmul.f32 %v190, %v202
        %v222 = vadd.f32 %v221, 0.0
        %v223 = vmul.f32 %v193, %v205
        %v224 = vadd.f32 %v222, %v223
        %v225 = vmul.f32 %v190, %v190
        %v226 = vmul.f32 %v193, %v193
        %v227 = vadd.f32 %v225, %v226
        %v228 = vsub.f32 %v227, 1.0
        %v229 = vmul.f32 %v228, %v228
        %v230 = vadd.f32 %v229, 0.0
        %v231 = vsub.f32 0.0, %v187
        %v232 = vmax.f32 %v231, 0.0
        %v233 = vsub.f32 %v187, 20.0
        %v234 = vmax.f32 %v233, 0.0
        %v235 = vadd.f32 %v232, %v234
        %v236 = vsub.f32 1.0, %v196
        %v237 = vmax.f32 %v236, 0.0
        %v238 = vadd.f32 %v235, %v237
        %v239 = vsub.f32 %v196, 25.0
        %v240 = vmax.f32 %v239, 0.0
        %v241 = vadd.f32 %v238, %v240
        %v242 = vadd.f32 %v241, 0.0
        %v243 = vmul.f32 %v196, %v196
        %v244 = vmul.f32 %v243, 1.5613099
        %v245 = vadd.f32 %v244, 1e-06
        %v246 = vrcp.pop %v245
        %v247 = vmul.f32 %v187, %v246
        %v248 = vsub.f32 %v247, 0.14
        %v249 = vmax.f32 %v248, 0.0
        %v250 = vadd.f32 %v249, 0.0
        %v251 = vsub.f32 0.01, %v247
        %v252 = vmax.f32 %v251, 0.0
        %v253 = vadd.f32 %v252, 0.0
        %v254 = vmul.f32 %v187, %v187
        %v255 = vadd.f32 %v254, 0.0
        %v256 = vmul.f32 %v254, %v254
        %v257 = vadd.f32 %v256, 0.0
        %s258 = scalar_lea.vmem %s151, 8 [#allocation5]
        %v259 = vld [vmem:[%s258] sm:$0xff]
        %s260 = sadd.s32 8, 16
        %s261 = scalar_lea.vmem %s151, %s260 [#allocation5]
        %v262 = vld [vmem:[%s261] sm:$0xff]
        %s263 = sadd.s32 8, 32
        %s264 = scalar_lea.vmem %s151, %s263 [#allocation5]
        %v265 = vld [vmem:[%s264] sm:$0xff]
        %s266 = sadd.s32 8, 48
        %s267 = scalar_lea.vmem %s151, %s266 [#allocation5]
        %v268 = vld [vmem:[%s267] sm:$0xff]
        %s269 = sadd.s32 8, 64
        %s270 = scalar_lea.vmem %s151, %s269 [#allocation5]
        %v271 = vld [vmem:[%s270] sm:$0xff]
        %s272 = sadd.s32 8, 80
        %s273 = scalar_lea.vmem %s151, %s272 [#allocation5]
        %v274 = vld [vmem:[%s273] sm:$0xff]
        %s275 = sadd.s32 8, 96
        %s276 = scalar_lea.vmem %s151, %s275 [#allocation5]
        %v277 = vld [vmem:[%s276] sm:$0xff]
        %s278 = sadd.s32 8, 112
        %s279 = scalar_lea.vmem %s151, %s278 [#allocation5]
        %v280 = vld [vmem:[%s279] sm:$0xff]
        %v281 = vsub.f32 %v259, %v271
        %v282 = vmul.f32 %v281, %v281
        %v283 = vadd.f32 %v214, %v282
        %v284 = vsub.f32 %v268, %v280
        %v285 = vmul.f32 %v284, %v284
        %v286 = vadd.f32 %v283, %v285
        %v287 = vsub.f32 %v262, %v274
        %v288 = vmul.f32 %v287, %v287
        %v289 = vadd.f32 %v220, %v288
        %v290 = vsub.f32 %v265, %v277
        %v291 = vmul.f32 %v290, %v290
        %v292 = vadd.f32 %v289, %v291
        %v293 = vmul.f32 %v262, %v274
        %v294 = vadd.f32 %v224, %v293
        %v295 = vmul.f32 %v265, %v277
        %v296 = vadd.f32 %v294, %v295
        %v297 = vmul.f32 %v262, %v262
        %v298 = vmul.f32 %v265, %v265
        %v299 = vadd.f32 %v297, %v298
        %v300 = vsub.f32 %v299, 1.0
        %v301 = vmul.f32 %v300, %v300
        %v302 = vadd.f32 %v230, %v301
        %v303 = vsub.f32 0.0, %v259
        %v304 = vmax.f32 %v303, 0.0
        %v305 = vsub.f32 %v259, 20.0
        %v306 = vmax.f32 %v305, 0.0
        %v307 = vadd.f32 %v304, %v306
        %v308 = vsub.f32 1.0, %v268
        %v309 = vmax.f32 %v308, 0.0
        %v310 = vadd.f32 %v307, %v309
        %v311 = vsub.f32 %v268, 25.0
        %v312 = vmax.f32 %v311, 0.0
        %v313 = vadd.f32 %v310, %v312
        %v314 = vadd.f32 %v242, %v313
        %v315 = vmul.f32 %v268, %v268
        %v316 = vmul.f32 %v315, 1.5613099
        %v317 = vadd.f32 %v316, 1e-06
        %v318 = vrcp.pop %v317
        %v319 = vmul.f32 %v259, %v318
        %v320 = vsub.f32 %v319, 0.14
        %v321 = vmax.f32 %v320, 0.0
        %v322 = vadd.f32 %v250, %v321
        %v323 = vsub.f32 0.01, %v319
        %v324 = vmax.f32 %v323, 0.0
        %v325 = vadd.f32 %v253, %v324
        %v326 = vmul.f32 %v259, %v259
        %v327 = vadd.f32 %v255, %v326
        %v328 = vmul.f32 %v326, %v326
        %v329 = vadd.f32 %v257, %v328
        %v330 = vld [vmem:[#allocation2] sm:$0xff]
        %v331 = vadd.f32 %v330, %v286
        %332 = vst [vmem:[#allocation2] sm:$0xff] %v331
        %s333 = scalar_lea.vmem [#allocation2], 8
        %v334 = vld [vmem:[%s333] sm:$0xff]
        %v335 = vadd.f32 %v334, %v292
        %336 = vst [vmem:[%s333] sm:$0xff] %v335
        %s337 = scalar_lea.vmem [#allocation2], 16
        %v338 = vld [vmem:[%s337] sm:$0xff]
        %v339 = vadd.f32 %v338, %v296
        %340 = vst [vmem:[%s337] sm:$0xff] %v339
        %s341 = scalar_lea.vmem [#allocation2], 24
        %v342 = vld [vmem:[%s341] sm:$0xff]
        %v343 = vadd.f32 %v342, %v302
        %344 = vst [vmem:[%s341] sm:$0xff] %v343
        %s345 = scalar_lea.vmem [#allocation2], 32
        %v346 = vld [vmem:[%s345] sm:$0xff]
        %v347 = vadd.f32 %v346, %v314
        %348 = vst [vmem:[%s345] sm:$0xff] %v347
        %s349 = scalar_lea.vmem [#allocation2], 40
        %v350 = vld [vmem:[%s349] sm:$0xff]
        %v351 = vadd.f32 %v350, %v322
        %352 = vst [vmem:[%s349] sm:$0xff] %v351
        %s353 = scalar_lea.vmem [#allocation2], 48
        %v354 = vld [vmem:[%s353] sm:$0xff]
        %v355 = vadd.f32 %v354, %v325
        %356 = vst [vmem:[%s353] sm:$0xff] %v355
        %v357 = vld [vmem:[#allocation3] sm:$0xff]
        %v358 = vadd.f32 %v357, %v327
        %359 = vst [vmem:[#allocation3] sm:$0xff] %v358
        %s360 = scalar_lea.vmem [#allocation3], 8
        %v361 = vld [vmem:[%s360] sm:$0xff]
        %v362 = vadd.f32 %v361, %v329
        %363 = vst [vmem:[%s360] sm:$0xff] %v362
        %p364 = scmp.eq.s32.totalorder %s21, 2
        // Predicated region
        $region37: #{tpu_custom_call.1} parent=23 // pred_check
          %p365 = pneg %p364
        $region38: #{tpu_custom_call.1} parent=23 // pred_check_branch
          %367 = sbr.rel (%p365) target = $region40
        $region39: #{tpu_custom_call.1} parent=23 // pred_region
          %v368 = vld [vmem:[#allocation3] sm:$0xff]
          %369 = vadd.xlane.f32.xlu0 %v368
          %v370 = vpop.xlane.xlu0 %369
          %v371 = vrot.slane %v370, 4
          %v372 = vadd.f32 %v370, %v371
          %v373 = vrot.slane %v372, 2
          %v374 = vadd.f32 %v372, %v373
          %v375 = vrot.slane %v374, 1
          %v376 = vadd.f32 %v374, %v375
          %s377 = vtos %v376
          %v378 = vld [vmem:[%s360] sm:$0xff]
          %379 = vadd.xlane.f32.xlu0 %v378
          %v380 = vpop.xlane.xlu0 %379
          %v381 = vrot.slane %v380, 4
          %v382 = vadd.f32 %v380, %v381
          %v383 = vrot.slane %v382, 2
          %v384 = vadd.f32 %v382, %v383
          %v385 = vrot.slane %v384, 1
          %v386 = vadd.f32 %v384, %v385
          %s387 = vtos %v386
          %s388 = smul.f32 %s377, %s377
          %s389 = smul.f32 %s388, 0.00016666666
          %s390 = ssub.f32 %s387, %s389
          %s391 = smul.f32 %s390, 0.00016669444
          %s392 = sld [smem:[#allocation4]]
          %s393 = smul.f32 %s391, 1579813.4
          %s394 = sadd.f32 %s392, %s393
          %s395 = scalar_lea.smem [#allocation4], 0
          %396 = sst [smem:[%s395]] %s394
        $region40: #{tpu_custom_call.1} parent=23 // pred_fallthru
          _
        %p397 = scmp.eq.s32.totalorder %s20, 1
        %p398 = pnand %p397, %p364
        %p399 = pneg %p398
        // Predicated region
        $region41: #{tpu_custom_call.1} parent=23 // pred_check
          _
        $region42: #{tpu_custom_call.1} parent=23 // pred_check_branch
          %401 = sbr.rel (%p398) target = $region44
        $region43: #{tpu_custom_call.1} parent=23 // pred_region
          %v402 = vld [vmem:[#allocation2] sm:$0xff]
          %403 = vadd.xlane.f32.xlu0 %v402
          %v404 = vpop.xlane.xlu0 %403
          %v405 = vrot.slane %v404, 4
          %v406 = vadd.f32 %v404, %v405
          %v407 = vrot.slane %v406, 2
          %v408 = vadd.f32 %v406, %v407
          %v409 = vrot.slane %v408, 1
          %v410 = vadd.f32 %v408, %v409
          %s411 = vtos %v410
          %s412 = smul.f32 %s411, 8.333333e-05
          %v413 = vld [vmem:[%s333] sm:$0xff]
          %414 = vadd.xlane.f32.xlu0 %v413
          %v415 = vpop.xlane.xlu0 %414
          %v416 = vrot.slane %v415, 4
          %v417 = vadd.f32 %v415, %v416
          %v418 = vrot.slane %v417, 2
          %v419 = vadd.f32 %v417, %v418
          %v420 = vrot.slane %v419, 1
          %v421 = vadd.f32 %v419, %v420
          %s422 = vtos %v421
          %s423 = smul.f32 %s422, 8.333333e-05
          %v424 = vld [vmem:[%s337] sm:$0xff]
          %425 = vadd.xlane.f32.xlu0 %v424
          %v426 = vpop.xlane.xlu0 %425
          %v427 = vrot.slane %v426, 4
          %v428 = vadd.f32 %v426, %v427
          %v429 = vrot.slane %v428, 2
          %v430 = vadd.f32 %v428, %v429
          %v431 = vrot.slane %v430, 1
          %v432 = vadd.f32 %v430, %v431
          %s433 = vtos %v432
          %s434 = smul.f32 %s433, 8.333333e-05
          %s435 = ssub.f32 1.0, %s434
          %v436 = vld [vmem:[%s341] sm:$0xff]
          %437 = vadd.xlane.f32.xlu0 %v436
          %v438 = vpop.xlane.xlu0 %437
          %v439 = vrot.slane %v438, 4
          %v440 = vadd.f32 %v438, %v439
          %v441 = vrot.slane %v440, 2
          %v442 = vadd.f32 %v440, %v441
          %v443 = vrot.slane %v442, 1
          %v444 = vadd.f32 %v442, %v443
          %s445 = vtos %v444
          %s446 = ssub.f32 %s445, 288.0
          %s447 = smul.f32 %s446, 8.333333e-05
          %v448 = vld [vmem:[%s345] sm:$0xff]
          %449 = vadd.xlane.f32.xlu0 %v448
          %v450 = vpop.xlane.xlu0 %449
          %v451 = vrot.slane %v450, 4
          %v452 = vadd.f32 %v450, %v451
          %v453 = vrot.slane %v452, 2
          %v454 = vadd.f32 %v452, %v453
          %v455 = vrot.slane %v454, 1
          %v456 = vadd.f32 %v454, %v455
          %s457 = vtos %v456
          %s458 = ssub.f32 %s457, 288.0
          %s459 = smul.f32 %s458, 8.333333e-05
          %v460 = vld [vmem:[%s349] sm:$0xff]
          %461 = vadd.xlane.f32.xlu0 %v460
          %v462 = vpop.xlane.xlu0 %461
          %v463 = vrot.slane %v462, 4
          %v464 = vadd.f32 %v462, %v463
          %v465 = vrot.slane %v464, 2
          %v466 = vadd.f32 %v464, %v465
          %v467 = vrot.slane %v466, 1
          %v468 = vadd.f32 %v466, %v467
          %s469 = vtos %v468
          %s470 = smul.f32 %s469, 8.333333e-05
          %v471 = vld [vmem:[%s353] sm:$0xff]
          %472 = vadd.xlane.f32.xlu0 %v471
          %v473 = vpop.xlane.xlu0 %472
          %v474 = vrot.slane %v473, 4
          %v475 = vadd.f32 %v473, %v474
          %v476 = vrot.slane %v475, 2
          %v477 = vadd.f32 %v475, %v476
          %v478 = vrot.slane %v477, 1
          %v479 = vadd.f32 %v477, %v478
          %s480 = vtos %v479
          %s481 = ssub.f32 %s480, 2.88
          %s482 = smul.f32 %s481, 8.333333e-05
          %s483 = sadd.f32 %s423, %s435
          %s484 = sadd.f32 %s412, %s483
          %s485 = smul.f32 %s447, 0.1
          %s486 = sadd.f32 %s484, %s485
          %s487 = sadd.f32 %s459, %s447
          %s488 = sadd.f32 %s487, %s470
          %s489 = sld [smem:[#allocation4]]
          %s490 = smul.f32 %s489, 0.5
          %s491 = sadd.f32 %s482, %s470
          %s492 = smul.f32 %s488, 0.1
          %s493 = sadd.f32 %s486, %s492
          %s494 = smul.f32 %s490, 0.05
          %s495 = sadd.f32 %s493, %s494
          %s496 = smul.f32 %s491, 0.1
          %s497 = sadd.f32 %s495, %s496
          %s498 = scalar_lea.smem [#allocation8], 0
          %499 = sst [smem:[%s498]] %s497
          %s500 = scalar_lea.smem [#allocation8], 1
          %501 = sst [smem:[%s500]] %s486
          %s502 = scalar_lea.smem [#allocation8], 2
          %503 = sst [smem:[%s502]] %s423
          %s504 = scalar_lea.smem [#allocation8], 3
          %505 = sst [smem:[%s504]] %s435
          %s506 = scalar_lea.smem [#allocation8], 4
          %507 = sst [smem:[%s506]] %s488
          %s508 = scalar_lea.smem [#allocation8], 5
          %509 = sst [smem:[%s508]] %s490
          %s510 = scalar_lea.smem [#allocation8], 6
          %511 = sst [smem:[%s510]] %s491
          %s512 = scalar_lea.smem [#allocation8], 7
          %513 = sst [smem:[%s512]] 0.0
        $region44: #{tpu_custom_call.1} parent=23 // pred_fallthru
          _
        // Predicated region
        $region45: #{tpu_custom_call.1} parent=23 // pred_check
          %p514 = pneg %p69
        $region46: #{tpu_custom_call.1} parent=23 // pred_check_branch
          %516 = sbr.rel (%p514) target = $region48
        $region47: #{tpu_custom_call.1} parent=23 // pred_region
          %518 = vsyncadd [#allocation7], 0
          %s520 = sshll.u32 %s1, 4
          %s521 = int_to_ptr.hbm [resolvable:$true] %s520
          %523 = dma.smem_to_hbm [#allocation8], 16, %s521, [#allocation7]
        $region48: #{tpu_custom_call.1} parent=23 // pred_fallthru
          _
        // Predicated region
        $region49: #{tpu_custom_call.1} parent=23 // pred_check
          %p524 = pneg %p69
        $region50: #{tpu_custom_call.1} parent=23 // pred_check_branch
          %526 = sbr.rel (%p524) target = $region52
        $region51: #{tpu_custom_call.1} parent=23 // pred_region
          %528 = dma.done [#allocation7], 16
        $region52: #{tpu_custom_call.1} parent=23 // pred_fallthru
          _
        %529 = sfence
      $region24: #{tpu_custom_call.1} parent=5 // pred_fallthru
        _
      %p530 = scmp.le.s32.totalorder 2, %s11
      // Predicated region
      $region53: #{tpu_custom_call.1} parent=5 // pred_check
        %p531 = pneg %p530
      $region54: #{tpu_custom_call.1} parent=5 // pred_check_branch
        %533 = sbr.rel (%p531) target = $region56
      $region55: #{tpu_custom_call.1} parent=5 // pred_region
        %s534 = ssub.s32 %s11, 2
      $region56: #{tpu_custom_call.1} parent=5 // pred_fallthru
        _
    $region6: #{tpu_custom_call.1} parent=1 // loop_footer
      %s15 = sadd.s32 1, %s11
    $region7: #{tpu_custom_call.1} parent=1 // loop_footer_branch
      %10 = sbr.rel target = $region3
    $region8: #{tpu_custom_call.1} parent=1 // loop_exit
      _
    %535 = vsyncpa [#allocation6], 1
    %s536 = scalar_lea.sflag [#allocation6], 1
    %537 = vsyncpa %s536, 1
    %538 = vsyncpa [#allocation7], 1
    %s539 = scalar_lea.sflag [#allocation7], 1
    %540 = vsyncpa %s539, 1

</llo_original>
